<compile_context>
chip_gen: v7x
topology: tpu7x:2x2x1
jax: 0.10.0
libtpu: 0.0.40
codegen_flags: <defaults>
</compile_context>

<pallas_src>
import functools

import jax
import jax.numpy as jnp
from jax.experimental import pallas as pl
from jax.experimental.pallas import tpu as pltpu

NUM_HIDDEN = 3          # FCBlock num_hidden_layers (module default)
LANE = 128              # TPU lane width -> lane-dense output padding


def film_fused_kernel(z_ref, wh_ref, bh_ref, wo_ref, bo_ref, out_ref):
    """One grid step = one hypernetwork (FCBlock):
    4 x (Linear + ReLU) then the outermost Linear. The FILM '+1' is pre-folded into the
    packed output bias, so this is a pure matmul chain ending in one lane-dense store."""
    h = z_ref[...]
    for k in range(NUM_HIDDEN + 1):            # static, fully unrolled
        h = jnp.dot(h, wh_ref[0, k], preferred_element_type=jnp.float32) + bh_ref[0, k]
        h = jnp.maximum(h, 0.0)
    out_ref[0] = jnp.dot(h, wo_ref[0], preferred_element_type=jnp.float32) + bo_ref[0]


@functools.partial(jax.jit, static_argnames=("cs",))
def film_forward(z, wh, bh, wo, bo, *, cs):
    """All hypernetworks in ONE pallas_call (grid over nets); per-net slicing done under jit."""
    n_nets = wh.shape[0]
    b, latent = z.shape
    two_c_pad = wo.shape[-1]
    c_pad = two_c_pad // 2

    out = pl.pallas_call(
        film_fused_kernel,
        grid=(n_nets,),
        in_specs=[
            pl.BlockSpec((b, latent), lambda n: (0, 0)),                                 # z (shared)
            pl.BlockSpec((1, NUM_HIDDEN + 1, latent, latent), lambda n: (n, 0, 0, 0)),   # hidden W
            pl.BlockSpec((1, NUM_HIDDEN + 1, 1, latent), lambda n: (n, 0, 0, 0)),        # hidden b
            pl.BlockSpec((1, latent, two_c_pad), lambda n: (n, 0, 0)),                   # out W (packed)
            pl.BlockSpec((1, 1, two_c_pad), lambda n: (n, 0, 0)),                        # out b (packed, +1 folded)
        ],
        out_specs=pl.BlockSpec((1, b, two_c_pad), lambda n: (n, 0, 0)),                  # gamma|beta slab
        out_shape=jax.ShapeDtypeStruct((n_nets, b, two_c_pad), jnp.float32),
        compiler_params=pltpu.CompilerParams(dimension_semantics=("parallel",)),
    )(z, wh, bh, wo, bo)

    params = []
    for n, c in enumerate(cs):
        params.append({
            "gamma": out[n, :, None, :c],                      # (B, 1, C); '+1' already folded in
            "beta": out[n, :, None, c_pad:c_pad + c],          # (B, 1, C)
        })
    return params


def _init_linear(key, fan_in, fan_out):
    kw, kb = jax.random.split(key)
    w = jax.random.normal(kw, (fan_in, fan_out), jnp.float32) * (1.0 / jnp.sqrt(fan_in))
    b = jax.random.normal(kb, (1, fan_out), jnp.float32) * 0.01
    return w, b


class FILMNetworkPallas:
    """JAX/Pallas port of FILMNetwork: one FCBlock hypernetwork per hypo parameter,
    all fused into a single Pallas kernel over a grid of nets."""

    def __init__(self, hypo_param_shapes, latent_dim, key, num_hidden=NUM_HIDDEN):
        assert num_hidden == NUM_HIDDEN, "kernel is unrolled for num_hidden=3"
        self.latent_dim = latent_dim
        self.names = []
        self.param_shapes = []
        self.nets = []          # per-net param dicts (kept for the pure-JAX reference)
        cs = []
        for name, shape in hypo_param_shapes:
            self.names.append(name)
            self.param_shapes.append(shape)
            c = int(shape[0])
            cs.append(c)
            key, k0, k1, k2, k3, ko = jax.random.split(key, 6)
            w0, b0 = _init_linear(k0, latent_dim, latent_dim)
            w1, b1 = _init_linear(k1, latent_dim, latent_dim)
            w2, b2 = _init_linear(k2, latent_dim, latent_dim)
            w3, b3 = _init_linear(k3, latent_dim, latent_dim)
            wo, bo = _init_linear(ko, latent_dim, 2 * c)
            self.nets.append(dict(w0=w0, b0=b0, w1=w1, b1=b1, w2=w2, b2=b2,
                                  w3=w3, b3=b3, wo=wo, bo=bo))
        self.cs = tuple(cs)
        c_max = max(cs)
        self.c_pad = max(LANE, ((c_max + LANE - 1) // LANE) * LANE)

        # Stack everything across nets so one pallas_call handles all of them.
        wh, bh, wo_p, bo_p = [], [], [], []
        for p, c in zip(self.nets, self.cs):
            wh.append(jnp.stack([p["w0"], p["w1"], p["w2"], p["w3"]], axis=0))   # (4, L, L)
            bh.append(jnp.stack([p["b0"], p["b1"], p["b2"], p["b3"]], axis=0))   # (4, 1, L)
            # Output weight/bias re-packed lane-dense:
            #   gamma cols -> [0:c), beta cols -> [c_pad : c_pad + c); rest zero-padded.
            # The FILM '+1' is folded into the gamma bias columns here (exact same math
            # up to one rounding step), so the kernel has no post-processing at all.
            wpad = jnp.zeros((latent_dim, 2 * self.c_pad), jnp.float32)
            wpad = wpad.at[:, :c].set(p["wo"][:, :c])
            wpad = wpad.at[:, self.c_pad:self.c_pad + c].set(p["wo"][:, c:])
            bpad = jnp.zeros((1, 2 * self.c_pad), jnp.float32)
            bpad = bpad.at[:, :c].set(p["bo"][:, :c] + 1.0)
            bpad = bpad.at[:, self.c_pad:self.c_pad + c].set(p["bo"][:, c:])
            wo_p.append(wpad)
            bo_p.append(bpad)
        self.wh = jnp.stack(wh, axis=0)    # (N, 4, L, L)
        self.bh = jnp.stack(bh, axis=0)    # (N, 4, 1, L)
        self.wo = jnp.stack(wo_p, axis=0)  # (N, L, 2*C_pad)
        self.bo = jnp.stack(bo_p, axis=0)  # (N, 1, 2*C_pad)

    def __call__(self, z):
        return film_forward(z, self.wh, self.bh, self.wo, self.bo, cs=self.cs)


def _reference_fcblock(z, p):
    """Pure-JAX reference of one FCBlock for correctness checking."""
    h = jnp.maximum(z @ p["w0"] + p["b0"], 0.0)
    h = jnp.maximum(h @ p["w1"] + p["b1"], 0.0)
    h = jnp.maximum(h @ p["w2"] + p["b2"], 0.0)
    h = jnp.maximum(h @ p["w3"] + p["b3"], 0.0)
    return h @ p["wo"] + p["bo"]


if __name__ == "__main__":
    key = jax.random.PRNGKey(0)
    latent_dim = 32
    batch = 2

    # Synthetic hypo-module parameters (name, shape): a tiny 3-layer MLP.
    # Only shape[0] matters for FILM (gamma/beta width).
    hypo_param_shapes = [
        ("net.0.weight", (32, 3)),
        ("net.0.bias",   (32,)),
        ("net.2.weight", (32, 32)),
        ("net.2.bias",   (32,)),
        ("net.4.weight", (3, 32)),
        ("net.4.bias",   (3,)),
    ]

    key, kmodel, kz = jax.random.split(key, 3)
    model = FILMNetworkPallas(hypo_param_shapes, latent_dim, kmodel)

    z = jax.random.normal(kz, (batch, latent_dim), jnp.float32)

    params = model(z)
    jax.block_until_ready(params)

    # Verify fused-kernel output against the pure-JAX reference.
    for (name, shape), net_p, layer in zip(hypo_param_shapes, model.nets, params):
        C = int(shape[0])
        ref = _reference_fcblock(z, net_p)
        ref_gamma = ref[:, :C][:, None, :] + 1.0
        ref_beta = ref[:, C:][:, None, :]
        assert layer["gamma"].shape == (batch, 1, C)
        assert layer["beta"].shape == (batch, 1, C)
        assert jnp.allclose(layer["gamma"], ref_gamma, atol=1e-4, rtol=1e-4)
        assert jnp.allclose(layer["beta"], ref_beta, atol=1e-4, rtol=1e-4)

    print("KERNEL_OK")
</pallas_src>

<mosaic_0001>
module attributes {stable_mosaic.version = 11 : i64} {
  func.func @film_fused_kernel(%arg0: i32, %arg1: memref<2x32xf32, #tpu.memory_space<vmem>>, %arg2: memref<1x4x32x32xf32, #tpu.memory_space<vmem>>, %arg3: memref<1x4x1x32xf32, #tpu.memory_space<vmem>>, %arg4: memref<1x32x256xf32, #tpu.memory_space<vmem>>, %arg5: memref<1x1x256xf32, #tpu.memory_space<vmem>>, %arg6: memref<1x2x256xf32, #tpu.memory_space<vmem>>) attributes {dimension_semantics = [#tpu.dimension_semantics<parallel>], iteration_bounds = array<i64: 6>, scalar_prefetch = 0 : i64, scratch_operands = 0 : i64, tpu.core_type = #tpu.core_type<tc>, window_params = [{pipeline_mode = #tpu.pipeline_mode<synchronous>, transform_indices = @transform_0, window_bounds = array<i64: 2, 32>}, {transform_indices = @transform_1, window_bounds = array<i64: 1, 4, 32, 32>}, {transform_indices = @transform_2, window_bounds = array<i64: 1, 4, 1, 32>}, {transform_indices = @transform_3, window_bounds = array<i64: 1, 32, 256>}, {transform_indices = @transform_4, window_bounds = array<i64: 1, 1, 256>}, {transform_indices = @transform_5, window_bounds = array<i64: 1, 2, 256>}]} {
    %c0 = arith.constant 0 : index
    %c0_0 = arith.constant 0 : index
    %0 = vector.load %arg1[%c0, %c0_0] : memref<2x32xf32, #tpu.memory_space<vmem>>, vector<2x32xf32>
    %c0_1 = arith.constant 0 : index
    %c0_2 = arith.constant 0 : index
    %c0_3 = arith.constant 0 : index
    %c0_4 = arith.constant 0 : index
    %1 = vector.load %arg2[%c0_1, %c0_2, %c0_3, %c0_4] : memref<1x4x32x32xf32, #tpu.memory_space<vmem>>, vector<1x1x32x32xf32>
    %2 = vector.shape_cast %1 : vector<1x1x32x32xf32> to vector<32x32xf32>
    %cst = arith.constant dense<0.000000e+00> : vector<2x32xf32>
    %3 = tpu.matmul %0, %2, %cst {dimension_numbers = #tpu.dot_dimension_numbers<[1], [0], [0], [1], [0, 0, 1, 1], [], []>} : vector<2x32xf32>, vector<32x32xf32>, vector<2x32xf32> -> vector<2x32xf32>
    %c0_5 = arith.constant 0 : index
    %c0_6 = arith.constant 0 : index
    %c0_7 = arith.constant 0 : index
    %c0_8 = arith.constant 0 : index
    %4 = vector.load %arg3[%c0_5, %c0_6, %c0_7, %c0_8] : memref<1x4x1x32xf32, #tpu.memory_space<vmem>>, vector<1x1x1x32xf32>
    %5 = vector.shape_cast %4 : vector<1x1x1x32xf32> to vector<1x32xf32>
    %6 = vector.broadcast %5 : vector<1x32xf32> to vector<2x32xf32>
    %7 = arith.addf %3, %6 : vector<2x32xf32>
    %cst_9 = arith.constant 0.000000e+00 : f32
    %8 = vector.broadcast %cst_9 : f32 to vector<2x32xf32>
    %9 = arith.maximumf %7, %8 : vector<2x32xf32>
    %c0_10 = arith.constant 0 : index
    %c1 = arith.constant 1 : index
    %c0_11 = arith.constant 0 : index
    %c0_12 = arith.constant 0 : index
    %10 = vector.load %arg2[%c0_10, %c1, %c0_11, %c0_12] : memref<1x4x32x32xf32, #tpu.memory_space<vmem>>, vector<1x1x32x32xf32>
    %11 = vector.shape_cast %10 : vector<1x1x32x32xf32> to vector<32x32xf32>
    %cst_13 = arith.constant dense<0.000000e+00> : vector<2x32xf32>
    %12 = tpu.matmul %9, %11, %cst_13 {dimension_numbers = #tpu.dot_dimension_numbers<[1], [0], [0], [1], [0, 0, 1, 1], [], []>} : vector<2x32xf32>, vector<32x32xf32>, vector<2x32xf32> -> vector<2x32xf32>
    %c0_14 = arith.constant 0 : index
    %c1_15 = arith.constant 1 : index
    %c0_16 = arith.constant 0 : index
    %c0_17 = arith.constant 0 : index
    %13 = vector.load %arg3[%c0_14, %c1_15, %c0_16, %c0_17] : memref<1x4x1x32xf32, #tpu.memory_space<vmem>>, vector<1x1x1x32xf32>
    %14 = vector.shape_cast %13 : vector<1x1x1x32xf32> to vector<1x32xf32>
    %15 = vector.broadcast %14 : vector<1x32xf32> to vector<2x32xf32>
    %16 = arith.addf %12, %15 : vector<2x32xf32>
    %cst_18 = arith.constant 0.000000e+00 : f32
    %17 = vector.broadcast %cst_18 : f32 to vector<2x32xf32>
    %18 = arith.maximumf %16, %17 : vector<2x32xf32>
    %c0_19 = arith.constant 0 : index
    %c2 = arith.constant 2 : index
    %c0_20 = arith.constant 0 : index
    %c0_21 = arith.constant 0 : index
    %19 = vector.load %arg2[%c0_19, %c2, %c0_20, %c0_21] : memref<1x4x32x32xf32, #tpu.memory_space<vmem>>, vector<1x1x32x32xf32>
    %20 = vector.shape_cast %19 : vector<1x1x32x32xf32> to vector<32x32xf32>
    %cst_22 = arith.constant dense<0.000000e+00> : vector<2x32xf32>
    %21 = tpu.matmul %18, %20, %cst_22 {dimension_numbers = #tpu.dot_dimension_numbers<[1], [0], [0], [1], [0, 0, 1, 1], [], []>} : vector<2x32xf32>, vector<32x32xf32>, vector<2x32xf32> -> vector<2x32xf32>
    %c0_23 = arith.constant 0 : index
    %c2_24 = arith.constant 2 : index
    %c0_25 = arith.constant 0 : index
    %c0_26 = arith.constant 0 : index
    %22 = vector.load %arg3[%c0_23, %c2_24, %c0_25, %c0_26] : memref<1x4x1x32xf32, #tpu.memory_space<vmem>>, vector<1x1x1x32xf32>
    %23 = vector.shape_cast %22 : vector<1x1x1x32xf32> to vector<1x32xf32>
    %24 = vector.broadcast %23 : vector<1x32xf32> to vector<2x32xf32>
    %25 = arith.addf %21, %24 : vector<2x32xf32>
    %cst_27 = arith.constant 0.000000e+00 : f32
    %26 = vector.broadcast %cst_27 : f32 to vector<2x32xf32>
    %27 = arith.maximumf %25, %26 : vector<2x32xf32>
    %c0_28 = arith.constant 0 : index
    %c3 = arith.constant 3 : index
    %c0_29 = arith.constant 0 : index
    %c0_30 = arith.constant 0 : index
    %28 = vector.load %arg2[%c0_28, %c3, %c0_29, %c0_30] : memref<1x4x32x32xf32, #tpu.memory_space<vmem>>, vector<1x1x32x32xf32>
    %29 = vector.shape_cast %28 : vector<1x1x32x32xf32> to vector<32x32xf32>
    %cst_31 = arith.constant dense<0.000000e+00> : vector<2x32xf32>
    %30 = tpu.matmul %27, %29, %cst_31 {dimension_numbers = #tpu.dot_dimension_numbers<[1], [0], [0], [1], [0, 0, 1, 1], [], []>} : vector<2x32xf32>, vector<32x32xf32>, vector<2x32xf32> -> vector<2x32xf32>
    %c0_32 = arith.constant 0 : index
    %c3_33 = arith.constant 3 : index
    %c0_34 = arith.constant 0 : index
    %c0_35 = arith.constant 0 : index
    %31 = vector.load %arg3[%c0_32, %c3_33, %c0_34, %c0_35] : memref<1x4x1x32xf32, #tpu.memory_space<vmem>>, vector<1x1x1x32xf32>
    %32 = vector.shape_cast %31 : vector<1x1x1x32xf32> to vector<1x32xf32>
    %33 = vector.broadcast %32 : vector<1x32xf32> to vector<2x32xf32>
    %34 = arith.addf %30, %33 : vector<2x32xf32>
    %cst_36 = arith.constant 0.000000e+00 : f32
    %35 = vector.broadcast %cst_36 : f32 to vector<2x32xf32>
    %36 = arith.maximumf %34, %35 : vector<2x32xf32>
    %c0_37 = arith.constant 0 : index
    %c0_38 = arith.constant 0 : index
    %c0_39 = arith.constant 0 : index
    %37 = vector.load %arg4[%c0_37, %c0_38, %c0_39] : memref<1x32x256xf32, #tpu.memory_space<vmem>>, vector<1x32x256xf32>
    %38 = vector.shape_cast %37 : vector<1x32x256xf32> to vector<32x256xf32>
    %cst_40 = arith.constant dense<0.000000e+00> : vector<2x256xf32>
    %39 = tpu.matmul %36, %38, %cst_40 {dimension_numbers = #tpu.dot_dimension_numbers<[1], [0], [0], [1], [0, 0, 1, 1], [], []>} : vector<2x32xf32>, vector<32x256xf32>, vector<2x256xf32> -> vector<2x256xf32>
    %c0_41 = arith.constant 0 : index
    %c0_42 = arith.constant 0 : index
    %c0_43 = arith.constant 0 : index
    %40 = vector.load %arg5[%c0_41, %c0_42, %c0_43] : memref<1x1x256xf32, #tpu.memory_space<vmem>>, vector<1x1x256xf32>
    %41 = vector.shape_cast %40 : vector<1x1x256xf32> to vector<1x256xf32>
    %42 = vector.broadcast %41 : vector<1x256xf32> to vector<2x256xf32>
    %43 = arith.addf %39, %42 : vector<2x256xf32>
    %c0_44 = arith.constant 0 : index
    %c0_45 = arith.constant 0 : index
    %c0_46 = arith.constant 0 : index
    %44 = vector.load %arg6[%c0_44, %c0_45, %c0_46] : memref<1x2x256xf32, #tpu.memory_space<vmem>>, vector<1x2x256xf32>
    %45 = vector.shape_cast %44 : vector<1x2x256xf32> to vector<2x256xf32>
    %46 = vector.shape_cast %43 : vector<2x256xf32> to vector<1x2x256xf32>
    tpu.vector_store %arg6[%c0_44, %c0_45, %c0_46], %46 {strides = array<i32>} : memref<1x2x256xf32, #tpu.memory_space<vmem>>, vector<1x2x256xf32>,
    return
  }
  func.func @transform_0(%arg0: i32) -> (i32, i32) {
    %c0_i32 = arith.constant 0 : i32
    %c0_i32_0 = arith.constant 0 : i32
    %c0_i32_1 = arith.constant 0 : i32
    return %c0_i32, %c0_i32_0 : i32, i32
  }
  func.func @transform_1(%arg0: i32) -> (i32, i32, i32, i32) {
    %c0_i32 = arith.constant 0 : i32
    %c0_i32_0 = arith.constant 0 : i32
    %c0_i32_1 = arith.constant 0 : i32
    %c0_i32_2 = arith.constant 0 : i32
    return %arg0, %c0_i32, %c0_i32_0, %c0_i32_1 : i32, i32, i32, i32
  }
  func.func @transform_2(%arg0: i32) -> (i32, i32, i32, i32) {
    %c0_i32 = arith.constant 0 : i32
    %c0_i32_0 = arith.constant 0 : i32
    %c0_i32_1 = arith.constant 0 : i32
    %c0_i32_2 = arith.constant 0 : i32
    return %arg0, %c0_i32, %c0_i32_0, %c0_i32_1 : i32, i32, i32, i32
  }
  func.func @transform_3(%arg0: i32) -> (i32, i32, i32) {
    %c0_i32 = arith.constant 0 : i32
    %c0_i32_0 = arith.constant 0 : i32
    %c0_i32_1 = arith.constant 0 : i32
    return %arg0, %c0_i32, %c0_i32_0 : i32, i32, i32
  }
  func.func @transform_4(%arg0: i32) -> (i32, i32, i32) {
    %c0_i32 = arith.constant 0 : i32
    %c0_i32_0 = arith.constant 0 : i32
    %c0_i32_1 = arith.constant 0 : i32
    return %arg0, %c0_i32, %c0_i32_0 : i32, i32, i32
  }
  func.func @transform_5(%arg0: i32) -> (i32, i32, i32) {
    %c0_i32 = arith.constant 0 : i32
    %c0_i32_0 = arith.constant 0 : i32
    %c0_i32_1 = arith.constant 0 : i32
    return %arg0, %c0_i32, %c0_i32_0 : i32, i32, i32
  }
}

</mosaic_0001>

<llo_original>
// kernel: film_forward.1
$region0: #{film_forward.1}
  #allocation0 [shape = 'u32[]', space=smem, size = 0x4, offset = 0x4, fixed_abs, tag = 'smem constant byte address 0x4 - core index']
  #allocation1 [shape = 'u32[144,128]{1,0:T(1,128)}', space=vmem, size = 0x12000, scoped, tag = 'internal scratch']
  %s0 = inlined_call_operand.hbm [shape: f32[2,32], index: 0, kind: input, shape index: {}]
  %s1 = inlined_call_operand.hbm [shape: f32[6,4,32,32], index: 1, kind: input, shape index: {}]
  %s2 = inlined_call_operand.hbm [shape: f32[6,4,1,32], index: 2, kind: input, shape index: {}]
  %s3 = inlined_call_operand.hbm [shape: f32[6,32,256], index: 3, kind: input, shape index: {}]
  %s4 = inlined_call_operand.hbm [shape: f32[6,1,256], index: 4, kind: input, shape index: {}]
  %s5 = inlined_call_operand.vmem [shape: f32[6,2,256], index: 5, kind: output, shape index: {}]
  %s6 = sld [smem:[#allocation0]]
  $region73: #{film_forward.1} parent=0
    _
  %s8 = ssub.s32 1, %s6
  %s9 = scalar_select 0, %s8, %s6
  $region1: #{film_forward.1} parent=0
    #allocation2 [shape = 'u8[1024]{0}', space=vmem, size = 0x400, scoped, tag = 'input window, operand 0, single buffered']
    #allocation3 [shape = 's32[2]{0}', space=sflag, size = 0x8, scoped, tag = 'scoped memory for film_forward.1']
    #allocation4 [shape = 'u8[131072]{0}', space=vmem, size = 0x20000, scoped, tag = 'input window, operand 1']
    #allocation5 [shape = 's32[2]{0}', space=sflag, size = 0x8, scoped, tag = 'scoped memory for film_forward.1']
    #allocation6 [shape = 'u8[4096]{0}', space=vmem, size = 0x1000, scoped, tag = 'input window, operand 2']
    #allocation7 [shape = 'u8[65536]{0}', space=vmem, size = 0x10000, scoped, tag = 'input window, operand 3']
    #allocation8 [shape = 's32[2]{0}', space=sflag, size = 0x8, scoped, tag = 'scoped memory for film_forward.1']
    #allocation9 [shape = 'u8[2048]{0}', space=vmem, size = 0x800, scoped, tag = 'input window, operand 4']
    %10 = vsyncpa [#allocation3], 0
    %11 = vsyncpa [#allocation5], 0
    %s12 = scalar_lea.sflag [#allocation5], 1
    %13 = vsyncpa %s12, 0
    %14 = vsyncpa [#allocation8], 0
    %s15 = scalar_lea.sflag [#allocation8], 1
    %16 = vsyncpa %s15, 0
    loop: start=0, step=1, limit=8
    $region2: #{film_forward.1} parent=1 // loop_pre_header
      _
    $region3: #{film_forward.1} parent=1 // loop_header
      %s18 = sphi 0, %s22
      %p19 = scmp.ge.s32.totalorder %s18, 8
      %s26 = sphi 0, %s26
      %s28 = sphi 0, %s26
      %s29 = sphi 0, %s28
      %s43 = sphi 0, %s29
      %s49 = sphi 0, %s51
      %s52 = sphi 0, %s49
      %s53 = sphi 0, %s52
      %s69 = sphi 0, %s53
      %s75 = sphi 0, %s77
      %s78 = sphi 0, %s75
      %s79 = sphi 0, %s78
      %s95 = sphi 0, %s79
      %s101 = sphi 0, %s103
      %s104 = sphi 0, %s101
      %s105 = sphi 0, %s104
      %s121 = sphi 0, %s105
      %s127 = sphi 0, %s129
      %s130 = sphi 0, %s127
      %s131 = sphi 0, %s130
      %s147 = sphi 0, %s131
      %s153 = sphi 0, %s155
      %s156 = sphi 0, %s153
      %s157 = sphi 0, %s156
      %s173 = sphi 0, %s157
    $region4: #{film_forward.1} parent=1 // loop_header_branch
      %21 = sbr.rel (%p19) target = $region8
    $region5: #{film_forward.1} parent=1 // loop_body
      %s23 = ssub.s32 %s18, 1
      %s24 = ssub.s32 %s18, 2
      %s25 = sadd.s32 %s18, 1
      %s27 = sadd.s32 %s26, 1
      %p30 = scmp.eq.s32.totalorder %s18, 5
      %p31 = scmp.ne.s32.totalorder %s26, %s28
      %p32 = scmp.eq.s32.totalorder %s18, 0
      %p33 = por %p31, %p32
      %p34 = scmp.ne.s32.totalorder %s26, %s28
      %p35 = scmp.eq.s32.totalorder %s23, 5
      %p36 = por %p34, %p35
      %p37 = scmp.ne.s32.totalorder %s28, %s29
      %p38 = scmp.eq.s32.totalorder %s23, 0
      %p39 = por %p37, %p38
      %p40 = scmp.ne.s32.totalorder %s28, %s29
      %p41 = scmp.eq.s32.totalorder %s24, 5
      %p42 = por %p40, %p41
      %p44 = scmp.ne.s32.totalorder %s29, %s43
      %p45 = scmp.eq.s32.totalorder %s24, 0
      %p46 = por %p44, %p45
      %s47 = ssub.s32 %s18, %s25
      %p48 = scmp.eq.s32.totalorder %s47, 0
      %s50 = sadd.s32 %s49, 1
      %s51 = scalar_select %p48, %s49, %s50
      %p54 = pneg %p48
      %p55 = scmp.eq.s32.totalorder %s18, 5
      %p56 = por %p54, %p55
      %p57 = scmp.ne.s32.totalorder %s49, %s52
      %p58 = scmp.eq.s32.totalorder %s18, 0
      %p59 = por %p57, %p58
      %p60 = scmp.ne.s32.totalorder %s49, %s52
      %p61 = scmp.eq.s32.totalorder %s23, 5
      %p62 = por %p60, %p61
      %p63 = scmp.ne.s32.totalorder %s52, %s53
      %p64 = scmp.eq.s32.totalorder %s23, 0
      %p65 = por %p63, %p64
      %p66 = scmp.ne.s32.totalorder %s52, %s53
      %p67 = scmp.eq.s32.totalorder %s24, 5
      %p68 = por %p66, %p67
      %p70 = scmp.ne.s32.totalorder %s53, %s69
      %p71 = scmp.eq.s32.totalorder %s24, 0
      %p72 = por %p70, %p71
      %s73 = ssub.s32 %s18, %s25
      %p74 = scmp.eq.s32.totalorder %s73, 0
      %s76 = sadd.s32 %s75, 1
      %s77 = scalar_select %p74, %s75, %s76
      %p80 = pneg %p74
      %p81 = scmp.eq.s32.totalorder %s18, 5
      %p82 = por %p80, %p81
      %p83 = scmp.ne.s32.totalorder %s75, %s78
      %p84 = scmp.eq.s32.totalorder %s18, 0
      %p85 = por %p83, %p84
      %p86 = scmp.ne.s32.totalorder %s75, %s78
      %p87 = scmp.eq.s32.totalorder %s23, 5
      %p88 = por %p86, %p87
      %p89 = scmp.ne.s32.totalorder %s78, %s79
      %p90 = scmp.eq.s32.totalorder %s23, 0
      %p91 = por %p89, %p90
      %p92 = scmp.ne.s32.totalorder %s78, %s79
      %p93 = scmp.eq.s32.totalorder %s24, 5
      %p94 = por %p92, %p93
      %p96 = scmp.ne.s32.totalorder %s79, %s95
      %p97 = scmp.eq.s32.totalorder %s24, 0
      %p98 = por %p96, %p97
      %s99 = ssub.s32 %s18, %s25
      %p100 = scmp.eq.s32.totalorder %s99, 0
      %s102 = sadd.s32 %s101, 1
      %s103 = scalar_select %p100, %s101, %s102
      %p106 = pneg %p100
      %p107 = scmp.eq.s32.totalorder %s18, 5
      %p108 = por %p106, %p107
      %p109 = scmp.ne.s32.totalorder %s101, %s104
      %p110 = scmp.eq.s32.totalorder %s18, 0
      %p111 = por %p109, %p110
      %p112 = scmp.ne.s32.totalorder %s101, %s104
      %p113 = scmp.eq.s32.totalorder %s23, 5
      %p114 = por %p112, %p113
      %p115 = scmp.ne.s32.totalorder %s104, %s105
      %p116 = scmp.eq.s32.totalorder %s23, 0
      %p117 = por %p115, %p116
      %p118 = scmp.ne.s32.totalorder %s104, %s105
      %p119 = scmp.eq.s32.totalorder %s24, 5
      %p120 = por %p118, %p119
      %p122 = scmp.ne.s32.totalorder %s105, %s121
      %p123 = scmp.eq.s32.totalorder %s24, 0
      %p124 = por %p122, %p123
      %s125 = ssub.s32 %s18, %s25
      %p126 = scmp.eq.s32.totalorder %s125, 0
      %s128 = sadd.s32 %s127, 1
      %s129 = scalar_select %p126, %s127, %s128
      %p132 = pneg %p126
      %p133 = scmp.eq.s32.totalorder %s18, 5
      %p134 = por %p132, %p133
      %p135 = scmp.ne.s32.totalorder %s127, %s130
      %p136 = scmp.eq.s32.totalorder %s18, 0
      %p137 = por %p135, %p136
      %p138 = scmp.ne.s32.totalorder %s127, %s130
      %p139 = scmp.eq.s32.totalorder %s23, 5
      %p140 = por %p138, %p139
      %p141 = scmp.ne.s32.totalorder %s130, %s131
      %p142 = scmp.eq.s32.totalorder %s23, 0
      %p143 = por %p141, %p142
      %p144 = scmp.ne.s32.totalorder %s130, %s131
      %p145 = scmp.eq.s32.totalorder %s24, 5
      %p146 = por %p144, %p145
      %p148 = scmp.ne.s32.totalorder %s131, %s147
      %p149 = scmp.eq.s32.totalorder %s24, 0
      %p150 = por %p148, %p149
      %s151 = ssub.s32 %s18, %s25
      %p152 = scmp.eq.s32.totalorder %s151, 0
      %s154 = sadd.s32 %s153, 1
      %s155 = scalar_select %p152, %s153, %s154
      %p158 = pneg %p152
      %p159 = scmp.eq.s32.totalorder %s18, 5
      %p160 = por %p158, %p159
      %p161 = scmp.ne.s32.totalorder %s153, %s156
      %p162 = scmp.eq.s32.totalorder %s18, 0
      %p163 = por %p161, %p162
      %p164 = scmp.ne.s32.totalorder %s153, %s156
      %p165 = scmp.eq.s32.totalorder %s23, 5
      %p166 = por %p164, %p165
      %p167 = scmp.ne.s32.totalorder %s156, %s157
      %p168 = scmp.eq.s32.totalorder %s23, 0
      %p169 = por %p167, %p168
      %p170 = scmp.ne.s32.totalorder %s156, %s157
      %p171 = scmp.eq.s32.totalorder %s24, 5
      %p172 = por %p170, %p171
      %p174 = scmp.ne.s32.totalorder %s157, %s173
      %p175 = scmp.eq.s32.totalorder %s24, 0
      %p176 = por %p174, %p175
      %p177 = scmp.le.s32.totalorder 1, %s18
      %p178 = scmp.lt.s32.totalorder %s18, 7
      %p179 = pnand %p177, %p178
      %p180 = pneg %p179
      // Predicated region
      $region9: #{film_forward.1} parent=5 // pred_check
        _
      $region10: #{film_forward.1} parent=5 // pred_check_branch
        %182 = sbr.rel (%p179) target = $region12
      $region11: #{film_forward.1} parent=5 // pred_region
        %s183 = ssub.s32 %s18, 1
        // Predicated region
        $region13: #{film_forward.1} parent=11 // pred_check
          %p184 = pneg %p39
        $region14: #{film_forward.1} parent=11 // pred_check_branch
          %186 = sbr.rel (%p184) target = $region16
        $region15: #{film_forward.1} parent=11 // pred_region
          %s188 = ssub.s32 32, 32
          %189 = vsyncadd [#allocation3], %s188
          %s191 = sshll.u32 [#allocation2], 4
          %s192 = int_to_ptr.vmem [resolvable:$true] %s191
          %194 = dma.hbm_to_vmem [thread:$0]  %s0, 32, %s192, [#allocation3]
        $region16: #{film_forward.1} parent=11 // pred_fallthru
          _
      $region12: #{film_forward.1} parent=5 // pred_fallthru
        _
      %p195 = scmp.lt.s32.totalorder %s18, 6
      // Predicated region
      $region17: #{film_forward.1} parent=5 // pred_check
        %p196 = pneg %p195
      $region18: #{film_forward.1} parent=5 // pred_check_branch
        %198 = sbr.rel (%p196) target = $region20
      $region19: #{film_forward.1} parent=5 // pred_region
        // Predicated region
        $region21: #{film_forward.1} parent=19 // pred_check
          %p199 = pneg %p59
        $region22: #{film_forward.1} parent=19 // pred_check_branch
          %201 = sbr.rel (%p199) target = $region24
        $region23: #{film_forward.1} parent=19 // pred_region
          %s202 = sand.u32 %s18, 1
          %s203 = scalar_lea.sflag [#allocation5], %s202
          %s204 = sand.u32 %s49, 1
          %s205 = smul.addr %s204, 128
          %s206 = scalar_lea.vmem [#allocation4], %s205
          %s208 = ssub.s32 2048, 2048
          %209 = vsyncadd %s203, %s208
          %s210 = smul.addr %s18, 16
          %s211 = smul.addr %s210, 128
          %s212 = scalar_lea.hbm %s1, %s211
          %s213 = sshll.u32 %s206, 4
          %s214 = int_to_ptr.vmem [resolvable:$true] %s213
          %219 = dma.hbm_to_vmem [thread:$0]  %s212, 2048, %s214, %s203, 128, 128, 8
        $region24: #{film_forward.1} parent=19 // pred_fallthru
          _
        // Predicated region
        $region25: #{film_forward.1} parent=19 // pred_check
          %p220 = pneg %p85
        $region26: #{film_forward.1} parent=19 // pred_check_branch
          %222 = sbr.rel (%p220) target = $region28
        $region27: #{film_forward.1} parent=19 // pred_region
          %s223 = sand.u32 %s18, 1
          %s224 = scalar_lea.sflag [#allocation5], %s223
          %s225 = sand.u32 %s75, 1
          %s226 = smul.addr %s225, 4
          %s227 = scalar_lea.vmem [#allocation6], %s226
          %s229 = ssub.s32 64, 64
          %230 = vsyncadd %s224, %s229
          %s231 = smul.addr %s18, 4
          %s232 = smul.addr %s231, 16
          %s233 = scalar_lea.hbm %s2, %s232
          %s234 = sshll.u32 %s227, 4
          %s235 = int_to_ptr.vmem [resolvable:$true] %s234
          %240 = dma.hbm_to_vmem [thread:$0]  %s233, 64, %s235, %s224, 16, 16, 1
        $region28: #{film_forward.1} parent=19 // pred_fallthru
          _
        // Predicated region
        $region29: #{film_forward.1} parent=19 // pred_check
          %p241 = pneg %p111
        $region30: #{film_forward.1} parent=19 // pred_check_branch
          %243 = sbr.rel (%p241) target = $region32
        $region31: #{film_forward.1} parent=19 // pred_region
          %s244 = sand.u32 %s18, 1
          %s245 = scalar_lea.sflag [#allocation8], %s244
          %s246 = sand.u32 %s101, 1
          %s247 = smul.addr %s246, 64
          %s248 = scalar_lea.vmem [#allocation7], %s247
          %s250 = ssub.s32 1024, 1024
          %251 = vsyncadd %s245, %s250
          %s252 = smul.addr %s18, 8
          %s253 = smul.addr %s252, 128
          %s254 = scalar_lea.hbm %s3, %s253
          %s255 = sshll.u32 %s248, 4
          %s256 = int_to_ptr.vmem [resolvable:$true] %s255
          %261 = dma.hbm_to_vmem [thread:$0]  %s254, 1024, %s256, %s245, 256, 256, 16
        $region32: #{film_forward.1} parent=19 // pred_fallthru
          _
        // Predicated region
        $region33: #{film_forward.1} parent=19 // pred_check
          %p262 = pneg %p137
        $region34: #{film_forward.1} parent=19 // pred_check_branch
          %264 = sbr.rel (%p262) target = $region36
        $region35: #{film_forward.1} parent=19 // pred_region
          %s265 = sand.u32 %s18, 1
          %s266 = scalar_lea.sflag [#allocation8], %s265
          %s267 = sand.u32 %s127, 1
          %s268 = smul.addr %s267, 2
          %s269 = scalar_lea.vmem [#allocation9], %s268
          %s271 = ssub.s32 32, 32
          %272 = vsyncadd %s266, %s271
          %s273 = smul.addr %s18, 2
          %s274 = smul.addr %s273, 16
          %s275 = scalar_lea.hbm %s4, %s274
          %s277 = sshll.u32 %s269, 4
          %s278 = int_to_ptr.vmem [resolvable:$true] %s277
          %280 = dma.hbm_to_vmem [thread:$0]  %s275, 32, %s278, %s266
        $region36: #{film_forward.1} parent=19 // pred_fallthru
          _
      $region20: #{film_forward.1} parent=5 // pred_fallthru
        _
      %p281 = scmp.le.s32.totalorder 1, %s18
      %p282 = scmp.lt.s32.totalorder %s18, 7
      %p283 = pnand %p281, %p282
      %p284 = pneg %p283
      // Predicated region
      $region37: #{film_forward.1} parent=5 // pred_check
        _
      $region38: #{film_forward.1} parent=5 // pred_check_branch
        %286 = sbr.rel (%p283) target = $region40
      $region39: #{film_forward.1} parent=5 // pred_region
        %s287 = ssub.s32 %s18, 1
        // Predicated region
        $region41: #{film_forward.1} parent=39 // pred_check
          %p288 = pneg %p39
        $region42: #{film_forward.1} parent=39 // pred_check_branch
          %290 = sbr.rel (%p288) target = $region44
        $region43: #{film_forward.1} parent=39 // pred_region
          %291 = dma.done [#allocation3], 32
        $region44: #{film_forward.1} parent=39 // pred_fallthru
          _
        %s292 = sand.u32 %s23, 1
        %s293 = scalar_lea.sflag [#allocation5], %s292
        %s294 = sand.u32 %s52, 1
        %s295 = smul.addr %s294, 128
        %s296 = scalar_lea.vmem [#allocation4], %s295
        // Predicated region
        $region45: #{film_forward.1} parent=39 // pred_check
          %p297 = pneg %p65
        $region46: #{film_forward.1} parent=39 // pred_check_branch
          %299 = sbr.rel (%p297) target = $region48
        $region47: #{film_forward.1} parent=39 // pred_region
          %300 = dma.done %s293, 2048
        $region48: #{film_forward.1} parent=39 // pred_fallthru
          _
        %s301 = sand.u32 %s23, 1
        %s302 = scalar_lea.sflag [#allocation5], %s301
        %s303 = sand.u32 %s78, 1
        %s304 = smul.addr %s303, 4
        %s305 = scalar_lea.vmem [#allocation6], %s304
        // Predicated region
        $region49: #{film_forward.1} parent=39 // pred_check
          %p306 = pneg %p91
        $region50: #{film_forward.1} parent=39 // pred_check_branch
          %308 = sbr.rel (%p306) target = $region52
        $region51: #{film_forward.1} parent=39 // pred_region
          %309 = dma.done %s302, 64
        $region52: #{film_forward.1} parent=39 // pred_fallthru
          _
        %s310 = sand.u32 %s23, 1
        %s311 = scalar_lea.sflag [#allocation8], %s310
        %s312 = sand.u32 %s104, 1
        %s313 = smul.addr %s312, 64
        %s314 = scalar_lea.vmem [#allocation7], %s313
        // Predicated region
        $region53: #{film_forward.1} parent=39 // pred_check
          %p315 = pneg %p117
        $region54: #{film_forward.1} parent=39 // pred_check_branch
          %317 = sbr.rel (%p315) target = $region56
        $region55: #{film_forward.1} parent=39 // pred_region
          %318 = dma.done %s311, 1024
        $region56: #{film_forward.1} parent=39 // pred_fallthru
          _
        %s319 = sand.u32 %s23, 1
        %s320 = scalar_lea.sflag [#allocation8], %s319
        %s321 = sand.u32 %s130, 1
        %s322 = smul.addr %s321, 2
        %s323 = scalar_lea.vmem [#allocation9], %s322
        // Predicated region
        $region57: #{film_forward.1} parent=39 // pred_check
          %p324 = pneg %p143
        $region58: #{film_forward.1} parent=39 // pred_check_branch
          %326 = sbr.rel (%p324) target = $region60
        $region59: #{film_forward.1} parent=39 // pred_region
          %327 = dma.done %s320, 32
        $region60: #{film_forward.1} parent=39 // pred_fallthru
          _
        %p328 = pneg %p39
        %p329 = pneg %p36
        %s330 = sand.u32 %s23, 1
        %s331 = scalar_lea.sflag [#allocation5], %s330
        %s332 = sand.u32 %s52, 1
        %s333 = smul.addr %s332, 128
        %s334 = scalar_lea.vmem [#allocation4], %s333
        %p335 = pneg %p65
        %p336 = pneg %p62
        %s337 = sand.u32 %s23, 1
        %s338 = scalar_lea.sflag [#allocation5], %s337
        %s339 = sand.u32 %s78, 1
        %s340 = smul.addr %s339, 4
        %s341 = scalar_lea.vmem [#allocation6], %s340
        %p342 = pneg %p91
        %p343 = pneg %p88
        %s344 = sand.u32 %s23, 1
        %s345 = scalar_lea.sflag [#allocation8], %s344
        %s346 = sand.u32 %s104, 1
        %s347 = smul.addr %s346, 64
        %s348 = scalar_lea.vmem [#allocation7], %s347
        %p349 = pneg %p117
        %p350 = pneg %p114
        %s351 = sand.u32 %s23, 1
        %s352 = scalar_lea.sflag [#allocation8], %s351
        %s353 = sand.u32 %s130, 1
        %s354 = smul.addr %s353, 2
        %s355 = scalar_lea.vmem [#allocation9], %s354
        %p356 = pneg %p143
        %p357 = pneg %p140
        %p358 = pneg %p169
        %p359 = pneg %p166
        %p360 = scmp.lt.s32.totalorder %s23, 5
        %s361 = scalar_select %p360, %s23, 5
        %s362 = smul.addr %s361, 2
        %s363 = smul.addr %s362, 2
        %s364 = scalar_lea.vmem %s5, %s363
        %p365 = scmp.lt.s32.totalorder %s23, 5
        %s366 = scalar_select %p365, %s23, 5
        %s367 = smul.addr %s366, 2
        %s368 = smul.addr %s367, 2
        %s369 = scalar_lea.vmem %s5, %s368
        %v370 = vld [vmem:[#allocation2] sm:$0x3]
        %v371 = vld [vmem:[%s296] sm:$0xff]
        %v372 = vld [vmem:[%s296 + $0x8] sm:$0xff]
        %v373 = vld [vmem:[%s296 + $0x10] sm:$0xff]
        %v374 = vld [vmem:[%s296 + $0x18] sm:$0xff]
        %v375 = vld [vmem:[%s305] sm:$0x1]
        %v377 = vlaneseq
        %v378 = vshrl.u32 %v377, 7
        %v379 = vsub.s32 0, %v378
        %v380 = vrot.slane %v375, %v379
        %vm382 = vcmask 261120
        %v384 = vsel %vm382, %v370, 0
        %386 = vmatprep.subr.mxu0 0.0
        %387 = vmatpush1.msra.mxu0 %v371
        %388 = vmatprep.subr.mxu0 0.0
        %389 = vmatpush1.msra.mxu0 %v372
        %390 = vmatprep.subr.mxu0 0.0
        %391 = vmatpush1.msra.mxu0 %v373
        %392 = vmatprep.subr.mxu0 0.0
        %393 = vmatpush1.msra.mxu0 %v374
        %394 = vmatprep.subr.mxu0 0.0
        %395 = vmatpush1.msra.mxu0 0.0
        %396 = vmatprep.subr.mxu0 0.0
        %397 = vmatpush1.msra.mxu0 0.0
        %398 = vmatprep.subr.mxu0 0.0
        %399 = vmatpush1.msra.mxu0 0.0
        %400 = vmatprep.subr.mxu0 0.0
        %401 = vmatpush1.msra.mxu0 0.0
        %402 = vmatprep.subr.mxu0 0.0
        %403 = vmatpush1.msra.mxu0 0.0
        %404 = vmatprep.subr.mxu0 0.0
        %405 = vmatpush1.msra.mxu0 0.0
        %406 = vmatprep.subr.mxu0 0.0
        %407 = vmatpush1.msra.mxu0 0.0
        %408 = vmatprep.subr.mxu0 0.0
        %409 = vmatpush1.msra.mxu0 0.0
        %410 = vmatprep.subr.mxu0 0.0
        %411 = vmatpush1.msra.mxu0 0.0
        %412 = vmatprep.subr.mxu0 0.0
        %413 = vmatpush1.msra.mxu0 0.0
        %414 = vmatprep.subr.mxu0 0.0
        %415 = vmatpush1.msra.mxu0 0.0
        %416 = vmatprep.subr.mxu0 0.0
        %417 = vmatpush1.msra.mxu0 0.0
        %418 = vmatprep.subr.mxu0 0.0
        %419 = vmatpush1.msra.mxu0 0.0
        %420 = vmatprep.subr.mxu0 0.0
        %421 = vmatpush1.msra.mxu0 0.0
        %422 = vmatprep.subr.mxu0 0.0
        %423 = vmatpush1.msra.mxu0 0.0
        %424 = vmatprep.subr.mxu0 0.0
        %425 = vmatpush1.msra.mxu0 0.0
        %426 = vmatprep.subr.mxu0 0.0
        %427 = vmatpush1.msra.mxu0 0.0
        %428 = vmatprep.subr.mxu0 0.0
        %429 = vmatpush1.msra.mxu0 0.0
        %430 = vmatprep.subr.mxu0 0.0
        %431 = vmatpush1.msra.mxu0 0.0
        %432 = vmatprep.subr.mxu0 0.0
        %433 = vmatpush1.msra.mxu0 0.0
        %434 = vmatprep.subr.mxu0 0.0
        %435 = vmatpush1.msra.mxu0 0.0
        %436 = vmatprep.subr.mxu0 0.0
        %437 = vmatpush1.msra.mxu0 0.0
        %438 = vmatprep.subr.mxu0 0.0
        %439 = vmatpush1.msra.mxu0 0.0
        %440 = vmatprep.subr.mxu0 0.0
        %441 = vmatpush1.msra.mxu0 0.0
        %442 = vmatprep.subr.mxu0 0.0
        %443 = vmatpush1.msra.mxu0 0.0
        %444 = vmatprep.subr.mxu0 0.0
        %445 = vmatpush1.msra.mxu0 0.0
        %446 = vmatprep.subr.mxu0 0.0
        %447 = vmatpush1.msra.mxu0 0.0
        %448 = vmatprep.subr.mxu0 0.0
        %449 = vmatpush1.msra.mxu0 0.0
        %450 = vmatprep.mubr.f32.mxu0 0.0
        %451 = vmatmul.mubr.f32.gmra.mrb[0].mxu0 %v384
        %v452 = vpop.f32.mrb[0].mxu0
        %v453 = vadd.f32 %v380, %v452
        %v454 = vpop.f32.mrb[0].mxu0
        %455 = vdwg.mxu0
        %v456 = vmax.f32 %v453, 0.0
        %s457 = scalar_lea.vmem %s296, 32 [#allocation4]
        %v458 = vld [vmem:[%s457] sm:$0xff]
        %v459 = vld [vmem:[%s457 + $0x8] sm:$0xff]
        %v460 = vld [vmem:[%s457 + $0x10] sm:$0xff]
        %v461 = vld [vmem:[%s457 + $0x18] sm:$0xff]
        %s462 = scalar_lea.vmem %s305, 1 [#allocation6]
        %v463 = vld [vmem:[%s462] sm:$0x1]
        %v465 = vlaneseq
        %v466 = vshrl.u32 %v465, 7
        %v467 = vsub.s32 0, %v466
        %v468 = vrot.slane %v463, %v467
        %v471 = vsel %vm382, %v456, 0
        %473 = vmatprep.subr.mxu0 0.0
        %474 = vmatpush1.msra.mxu0 %v458
        %475 = vmatprep.subr.mxu0 0.0
        %476 = vmatpush1.msra.mxu0 %v459
        %477 = vmatprep.subr.mxu0 0.0
        %478 = vmatpush1.msra.mxu0 %v460
        %479 = vmatprep.subr.mxu0 0.0
        %480 = vmatpush1.msra.mxu0 %v461
        %481 = vmatprep.subr.mxu0 0.0
        %482 = vmatpush1.msra.mxu0 0.0
        %483 = vmatprep.subr.mxu0 0.0
        %484 = vmatpush1.msra.mxu0 0.0
        %485 = vmatprep.subr.mxu0 0.0
        %486 = vmatpush1.msra.mxu0 0.0
        %487 = vmatprep.subr.mxu0 0.0
        %488 = vmatpush1.msra.mxu0 0.0
        %489 = vmatprep.subr.mxu0 0.0
        %490 = vmatpush1.msra.mxu0 0.0
        %491 = vmatprep.subr.mxu0 0.0
        %492 = vmatpush1.msra.mxu0 0.0
        %493 = vmatprep.subr.mxu0 0.0
        %494 = vmatpush1.msra.mxu0 0.0
        %495 = vmatprep.subr.mxu0 0.0
        %496 = vmatpush1.msra.mxu0 0.0
        %497 = vmatprep.subr.mxu0 0.0
        %498 = vmatpush1.msra.mxu0 0.0
        %499 = vmatprep.subr.mxu0 0.0
        %500 = vmatpush1.msra.mxu0 0.0
        %501 = vmatprep.subr.mxu0 0.0
        %502 = vmatpush1.msra.mxu0 0.0
        %503 = vmatprep.subr.mxu0 0.0
        %504 = vmatpush1.msra.mxu0 0.0
        %505 = vmatprep.subr.mxu0 0.0
        %506 = vmatpush1.msra.mxu0 0.0
        %507 = vmatprep.subr.mxu0 0.0
        %508 = vmatpush1.msra.mxu0 0.0
        %509 = vmatprep.subr.mxu0 0.0
        %510 = vmatpush1.msra.mxu0 0.0
        %511 = vmatprep.subr.mxu0 0.0
        %512 = vmatpush1.msra.mxu0 0.0
        %513 = vmatprep.subr.mxu0 0.0
        %514 = vmatpush1.msra.mxu0 0.0
        %515 = vmatprep.subr.mxu0 0.0
        %516 = vmatpush1.msra.mxu0 0.0
        %517 = vmatprep.subr.mxu0 0.0
        %518 = vmatpush1.msra.mxu0 0.0
        %519 = vmatprep.subr.mxu0 0.0
        %520 = vmatpush1.msra.mxu0 0.0
        %521 = vmatprep.subr.mxu0 0.0
        %522 = vmatpush1.msra.mxu0 0.0
        %523 = vmatprep.subr.mxu0 0.0
        %524 = vmatpush1.msra.mxu0 0.0
        %525 = vmatprep.subr.mxu0 0.0
        %526 = vmatpush1.msra.mxu0 0.0
        %527 = vmatprep.subr.mxu0 0.0
        %528 = vmatpush1.msra.mxu0 0.0
        %529 = vmatprep.subr.mxu0 0.0
        %530 = vmatpush1.msra.mxu0 0.0
        %531 = vmatprep.subr.mxu0 0.0
        %532 = vmatpush1.msra.mxu0 0.0
        %533 = vmatprep.subr.mxu0 0.0
        %534 = vmatpush1.msra.mxu0 0.0
        %535 = vmatprep.subr.mxu0 0.0
        %536 = vmatpush1.msra.mxu0 0.0
        %537 = vmatprep.mubr.f32.mxu0 0.0
        %538 = vmatmul.mubr.f32.gmra.mrb[0].mxu0 %v471
        %v539 = vpop.f32.mrb[0].mxu0
        %v540 = vadd.f32 %v468, %v539
        %v541 = vpop.f32.mrb[0].mxu0
        %542 = vdwg.mxu0
        %v543 = vmax.f32 %v540, 0.0
        %s544 = scalar_lea.vmem %s296, 64 [#allocation4]
        %v545 = vld [vmem:[%s544] sm:$0xff]
        %v546 = vld [vmem:[%s544 + $0x8] sm:$0xff]
        %v547 = vld [vmem:[%s544 + $0x10] sm:$0xff]
        %v548 = vld [vmem:[%s544 + $0x18] sm:$0xff]
        %s549 = scalar_lea.vmem %s305, 2 [#allocation6]
        %v550 = vld [vmem:[%s549] sm:$0x1]
        %v552 = vlaneseq
        %v553 = vshrl.u32 %v552, 7
        %v554 = vsub.s32 0, %v553
        %v555 = vrot.slane %v550, %v554
        %v558 = vsel %vm382, %v543, 0
        %560 = vmatprep.subr.mxu0 0.0
        %561 = vmatpush1.msra.mxu0 %v545
        %562 = vmatprep.subr.mxu0 0.0
        %563 = vmatpush1.msra.mxu0 %v546
        %564 = vmatprep.subr.mxu0 0.0
        %565 = vmatpush1.msra.mxu0 %v547
        %566 = vmatprep.subr.mxu0 0.0
        %567 = vmatpush1.msra.mxu0 %v548
        %568 = vmatprep.subr.mxu0 0.0
        %569 = vmatpush1.msra.mxu0 0.0
        %570 = vmatprep.subr.mxu0 0.0
        %571 = vmatpush1.msra.mxu0 0.0
        %572 = vmatprep.subr.mxu0 0.0
        %573 = vmatpush1.msra.mxu0 0.0
        %574 = vmatprep.subr.mxu0 0.0
        %575 = vmatpush1.msra.mxu0 0.0
        %576 = vmatprep.subr.mxu0 0.0
        %577 = vmatpush1.msra.mxu0 0.0
        %578 = vmatprep.subr.mxu0 0.0
        %579 = vmatpush1.msra.mxu0 0.0
        %580 = vmatprep.subr.mxu0 0.0
        %581 = vmatpush1.msra.mxu0 0.0
        %582 = vmatprep.subr.mxu0 0.0
        %583 = vmatpush1.msra.mxu0 0.0
        %584 = vmatprep.subr.mxu0 0.0
        %585 = vmatpush1.msra.mxu0 0.0
        %586 = vmatprep.subr.mxu0 0.0
        %587 = vmatpush1.msra.mxu0 0.0
        %588 = vmatprep.subr.mxu0 0.0
        %589 = vmatpush1.msra.mxu0 0.0
        %590 = vmatprep.subr.mxu0 0.0
        %591 = vmatpush1.msra.mxu0 0.0
        %592 = vmatprep.subr.mxu0 0.0
        %593 = vmatpush1.msra.mxu0 0.0
        %594 = vmatprep.subr.mxu0 0.0
        %595 = vmatpush1.msra.mxu0 0.0
        %596 = vmatprep.subr.mxu0 0.0
        %597 = vmatpush1.msra.mxu0 0.0
        %598 = vmatprep.subr.mxu0 0.0
        %599 = vmatpush1.msra.mxu0 0.0
        %600 = vmatprep.subr.mxu0 0.0
        %601 = vmatpush1.msra.mxu0 0.0
        %602 = vmatprep.subr.mxu0 0.0
        %603 = vmatpush1.msra.mxu0 0.0
        %604 = vmatprep.subr.mxu0 0.0
        %605 = vmatpush1.msra.mxu0 0.0
        %606 = vmatprep.subr.mxu0 0.0
        %607 = vmatpush1.msra.mxu0 0.0
        %608 = vmatprep.subr.mxu0 0.0
        %609 = vmatpush1.msra.mxu0 0.0
        %610 = vmatprep.subr.mxu0 0.0
        %611 = vmatpush1.msra.mxu0 0.0
        %612 = vmatprep.subr.mxu0 0.0
        %613 = vmatpush1.msra.mxu0 0.0
        %614 = vmatprep.subr.mxu0 0.0
        %615 = vmatpush1.msra.mxu0 0.0
        %616 = vmatprep.subr.mxu0 0.0
        %617 = vmatpush1.msra.mxu0 0.0
        %618 = vmatprep.subr.mxu0 0.0
        %619 = vmatpush1.msra.mxu0 0.0
        %620 = vmatprep.subr.mxu0 0.0
        %621 = vmatpush1.msra.mxu0 0.0
        %622 = vmatprep.subr.mxu0 0.0
        %623 = vmatpush1.msra.mxu0 0.0
        %624 = vmatprep.mubr.f32.mxu0 0.0
        %625 = vmatmul.mubr.f32.gmra.mrb[0].mxu0 %v558
        %v626 = vpop.f32.mrb[0].mxu0
        %v627 = vadd.f32 %v555, %v626
        %v628 = vpop.f32.mrb[0].mxu0
        %629 = vdwg.mxu0
        %v630 = vmax.f32 %v627, 0.0
        %s631 = scalar_lea.vmem %s296, 96 [#allocation4]
        %v632 = vld [vmem:[%s631] sm:$0xff]
        %v633 = vld [vmem:[%s631 + $0x8] sm:$0xff]
        %v634 = vld [vmem:[%s631 + $0x10] sm:$0xff]
        %v635 = vld [vmem:[%s631 + $0x18] sm:$0xff]
        %s636 = scalar_lea.vmem %s305, 3 [#allocation6]
        %v637 = vld [vmem:[%s636] sm:$0x1]
        %v639 = vlaneseq
        %v640 = vshrl.u32 %v639, 7
        %v641 = vsub.s32 0, %v640
        %v642 = vrot.slane %v637, %v641
        %v645 = vsel %vm382, %v630, 0
        %647 = vmatprep.subr.mxu0 0.0
        %648 = vmatpush1.msra.mxu0 %v632
        %649 = vmatprep.subr.mxu0 0.0
        %650 = vmatpush1.msra.mxu0 %v633
        %651 = vmatprep.subr.mxu0 0.0
        %652 = vmatpush1.msra.mxu0 %v634
        %653 = vmatprep.subr.mxu0 0.0
        %654 = vmatpush1.msra.mxu0 %v635
        %655 = vmatprep.subr.mxu0 0.0
        %656 = vmatpush1.msra.mxu0 0.0
        %657 = vmatprep.subr.mxu0 0.0
        %658 = vmatpush1.msra.mxu0 0.0
        %659 = vmatprep.subr.mxu0 0.0
        %660 = vmatpush1.msra.mxu0 0.0
        %661 = vmatprep.subr.mxu0 0.0
        %662 = vmatpush1.msra.mxu0 0.0
        %663 = vmatprep.subr.mxu0 0.0
        %664 = vmatpush1.msra.mxu0 0.0
        %665 = vmatprep.subr.mxu0 0.0
        %666 = vmatpush1.msra.mxu0 0.0
        %667 = vmatprep.subr.mxu0 0.0
        %668 = vmatpush1.msra.mxu0 0.0
        %669 = vmatprep.subr.mxu0 0.0
        %670 = vmatpush1.msra.mxu0 0.0
        %671 = vmatprep.subr.mxu0 0.0
        %672 = vmatpush1.msra.mxu0 0.0
        %673 = vmatprep.subr.mxu0 0.0
        %674 = vmatpush1.msra.mxu0 0.0
        %675 = vmatprep.subr.mxu0 0.0
        %676 = vmatpush1.msra.mxu0 0.0
        %677 = vmatprep.subr.mxu0 0.0
        %678 = vmatpush1.msra.mxu0 0.0
        %679 = vmatprep.subr.mxu0 0.0
        %680 = vmatpush1.msra.mxu0 0.0
        %681 = vmatprep.subr.mxu0 0.0
        %682 = vmatpush1.msra.mxu0 0.0
        %683 = vmatprep.subr.mxu0 0.0
        %684 = vmatpush1.msra.mxu0 0.0
        %685 = vmatprep.subr.mxu0 0.0
        %686 = vmatpush1.msra.mxu0 0.0
        %687 = vmatprep.subr.mxu0 0.0
        %688 = vmatpush1.msra.mxu0 0.0
        %689 = vmatprep.subr.mxu0 0.0
        %690 = vmatpush1.msra.mxu0 0.0
        %691 = vmatprep.subr.mxu0 0.0
        %692 = vmatpush1.msra.mxu0 0.0
        %693 = vmatprep.subr.mxu0 0.0
        %694 = vmatpush1.msra.mxu0 0.0
        %695 = vmatprep.subr.mxu0 0.0
        %696 = vmatpush1.msra.mxu0 0.0
        %697 = vmatprep.subr.mxu0 0.0
        %698 = vmatpush1.msra.mxu0 0.0
        %699 = vmatprep.subr.mxu0 0.0
        %700 = vmatpush1.msra.mxu0 0.0
        %701 = vmatprep.subr.mxu0 0.0
        %702 = vmatpush1.msra.mxu0 0.0
        %703 = vmatprep.subr.mxu0 0.0
        %704 = vmatpush1.msra.mxu0 0.0
        %705 = vmatprep.subr.mxu0 0.0
        %706 = vmatpush1.msra.mxu0 0.0
        %707 = vmatprep.subr.mxu0 0.0
        %708 = vmatpush1.msra.mxu0 0.0
        %709 = vmatprep.subr.mxu0 0.0
        %710 = vmatpush1.msra.mxu0 0.0
        %711 = vmatprep.mubr.f32.mxu0 0.0
        %712 = vmatmul.mubr.f32.gmra.mrb[0].mxu0 %v645
        %v713 = vpop.f32.mrb[0].mxu0
        %v714 = vadd.f32 %v642, %v713
        %v715 = vpop.f32.mrb[0].mxu0
        %716 = vdwg.mxu0
        %v717 = vmax.f32 %v714, 0.0
        %v718 = vld [vmem:[%s314] sm:$0xff]
        %v719 = vld [vmem:[%s314 + $0x8] sm:$0xff]
        %v720 = vld [vmem:[%s314 + $0x10] sm:$0xff]
        %v721 = vld [vmem:[%s314 + $0x18] sm:$0xff]
        %v722 = vld [vmem:[%s314 + $0x20] sm:$0xff]
        %v723 = vld [vmem:[%s314 + $0x28] sm:$0xff]
        %v724 = vld [vmem:[%s314 + $0x30] sm:$0xff]
        %v725 = vld [vmem:[%s314 + $0x38] sm:$0xff]
        %v726 = vld [vmem:[%s323] sm:$0x3]
        %v728 = vlaneseq
        %v729 = vshrl.u32 %v728, 7
        %v730 = vsub.s32 0, %v729
        %v731 = vrot.slane %v726, %v730
        %v732 = vlaneseq
        %v733 = vshrl.u32 %v732, 7
        %v734 = vsub.s32 1, %v733
        %v735 = vrot.slane %v726, %v734
        %v739 = vsel %vm382, %v717, 0
        %741 = vmatprep.subr.mxu0 %v719
        %742 = vmatpush1.msra.mxu0 %v718
        %743 = vmatprep.subr.mxu0 %v721
        %744 = vmatpush1.msra.mxu0 %v720
        %745 = vmatprep.subr.mxu0 %v723
        %746 = vmatpush1.msra.mxu0 %v722
        %747 = vmatprep.subr.mxu0 %v725
        %748 = vmatpush1.msra.mxu0 %v724
        %749 = vmatprep.subr.mxu0 0.0
        %750 = vmatpush1.msra.mxu0 0.0
        %751 = vmatprep.subr.mxu0 0.0
        %752 = vmatpush1.msra.mxu0 0.0
        %753 = vmatprep.subr.mxu0 0.0
        %754 = vmatpush1.msra.mxu0 0.0
        %755 = vmatprep.subr.mxu0 0.0
        %756 = vmatpush1.msra.mxu0 0.0
        %757 = vmatprep.subr.mxu0 0.0
        %758 = vmatpush1.msra.mxu0 0.0
        %759 = vmatprep.subr.mxu0 0.0
        %760 = vmatpush1.msra.mxu0 0.0
        %761 = vmatprep.subr.mxu0 0.0
        %762 = vmatpush1.msra.mxu0 0.0
        %763 = vmatprep.subr.mxu0 0.0
        %764 = vmatpush1.msra.mxu0 0.0
        %765 = vmatprep.subr.mxu0 0.0
        %766 = vmatpush1.msra.mxu0 0.0
        %767 = vmatprep.subr.mxu0 0.0
        %768 = vmatpush1.msra.mxu0 0.0
        %769 = vmatprep.subr.mxu0 0.0
        %770 = vmatpush1.msra.mxu0 0.0
        %771 = vmatprep.subr.mxu0 0.0
        %772 = vmatpush1.msra.mxu0 0.0
        %773 = vmatprep.subr.mxu0 0.0
        %774 = vmatpush1.msra.mxu0 0.0
        %775 = vmatprep.subr.mxu0 0.0
        %776 = vmatpush1.msra.mxu0 0.0
        %777 = vmatprep.subr.mxu0 0.0
        %778 = vmatpush1.msra.mxu0 0.0
        %779 = vmatprep.subr.mxu0 0.0
        %780 = vmatpush1.msra.mxu0 0.0
        %781 = vmatprep.subr.mxu0 0.0
        %782 = vmatpush1.msra.mxu0 0.0
        %783 = vmatprep.subr.mxu0 0.0
        %784 = vmatpush1.msra.mxu0 0.0
        %785 = vmatprep.subr.mxu0 0.0
        %786 = vmatpush1.msra.mxu0 0.0
        %787 = vmatprep.subr.mxu0 0.0
        %788 = vmatpush1.msra.mxu0 0.0
        %789 = vmatprep.subr.mxu0 0.0
        %790 = vmatpush1.msra.mxu0 0.0
        %791 = vmatprep.subr.mxu0 0.0
        %792 = vmatpush1.msra.mxu0 0.0
        %793 = vmatprep.subr.mxu0 0.0
        %794 = vmatpush1.msra.mxu0 0.0
        %795 = vmatprep.subr.mxu0 0.0
        %796 = vmatpush1.msra.mxu0 0.0
        %797 = vmatprep.subr.mxu0 0.0
        %798 = vmatpush1.msra.mxu0 0.0
        %799 = vmatprep.subr.mxu0 0.0
        %800 = vmatpush1.msra.mxu0 0.0
        %801 = vmatprep.subr.mxu0 0.0
        %802 = vmatpush1.msra.mxu0 0.0
        %803 = vmatprep.subr.mxu0 0.0
        %804 = vmatpush1.msra.mxu0 0.0
        %805 = vmatprep.mubr.f32.mxu0 0.0
        %806 = vmatmul.mubr.f32.gmra.mrb[0].mxu0 %v739
        %v807 = vpop.f32.mrb[0].mxu0
        %v808 = vadd.f32 %v731, %v807
        %v809 = vpop.f32.mrb[0].mxu0
        %v810 = vadd.f32 %v735, %v809
        %811 = vdwg.mxu0
        %v814 = vcombine.low %v808, %v810
        %v816 = vunpack.c.l.s4 1983009808
        %v817 = vunpack.c.0.s8 %v816
        %v818 = vlaneseq
        %v819 = vshrl.u32 %v818, 7
        %v820 = vsub.s32 %v817, %v819
        %v821 = vrot.slane %v814, %v820
        %823 = vst [vmem:[%s369] sm:$0xf] %v821
        %p824 = scmp.lt.s32.totalorder %s23, 5
        %s825 = scalar_select %p824, %s23, 5
        %s826 = smul.addr %s825, 2
        %s827 = smul.addr %s826, 2
        %s828 = scalar_lea.vmem %s5, %s827
        // Predicated region
        $region61: #{film_forward.1} parent=39 // pred_check
          %p829 = pneg %p166
        $region62: #{film_forward.1} parent=39 // pred_check_branch
          %831 = sbr.rel (%p829) target = $region64
        $region63: #{film_forward.1} parent=39 // pred_region
          _
        $region64: #{film_forward.1} parent=39 // pred_fallthru
          _
      $region40: #{film_forward.1} parent=5 // pred_fallthru
        _
      %p832 = scmp.le.s32.totalorder 2, %s18
      // Predicated region
      $region65: #{film_forward.1} parent=5 // pred_check
        %p833 = pneg %p832
      $region66: #{film_forward.1} parent=5 // pred_check_branch
        %835 = sbr.rel (%p833) target = $region68
      $region67: #{film_forward.1} parent=5 // pred_region
        %s836 = ssub.s32 %s18, 2
        // Predicated region
        $region69: #{film_forward.1} parent=67 // pred_check
          %p837 = pneg %p172
        $region70: #{film_forward.1} parent=67 // pred_check_branch
          %839 = sbr.rel (%p837) target = $region72
        $region71: #{film_forward.1} parent=67 // pred_region
          %p840 = scmp.lt.s32.totalorder %s24, 5
          %s841 = scalar_select %p840, %s24, 5
          %s842 = smul.addr %s841, 2
          %s843 = smul.addr %s842, 2
          %s844 = scalar_lea.vmem %s5, %s843
        $region72: #{film_forward.1} parent=67 // pred_fallthru
          _
      $region68: #{film_forward.1} parent=5 // pred_fallthru
        _
    $region6: #{film_forward.1} parent=1 // loop_footer
      %s22 = sadd.s32 1, %s18
    $region7: #{film_forward.1} parent=1 // loop_footer_branch
      %17 = sbr.rel target = $region3
    $region8: #{film_forward.1} parent=1 // loop_exit
      _
    %845 = vsyncpa [#allocation3], 1
    %s846 = scalar_lea.sflag [#allocation3], 1
    %847 = vsyncpa %s846, 1
    %848 = vsyncpa [#allocation5], 1
    %s849 = scalar_lea.sflag [#allocation5], 1
    %850 = vsyncpa %s849, 1
    %851 = vsyncpa [#allocation8], 1
    %s852 = scalar_lea.sflag [#allocation8], 1
    %853 = vsyncpa %s852, 1

</llo_original>
